<compile_context>
chip_gen: v6e
topology: v6e:2x2x1
jax: 0.10.0
libtpu: 0.0.40
codegen_flags: <defaults>
</compile_context>

<pallas_src>
import functools

import jax
import jax.numpy as jnp
from jax.experimental import pallas as pl
from jax.experimental.pallas import tpu as pltpu

_LANE = 128
_TARGET_BLOCK_BYTES = 4 * 1024 * 1024  # per-input reduce tile (f32 -> 8192 rows)


def _cdiv(a, b):
    return -(-a // b)


def _vmem_limit_bytes():
    """Scoped VMEM request with headroom below physical capacity (v7x: 64 MiB/TC)."""
    try:
        cap = pltpu.get_tpu_info().vmem_capacity_bytes
    except Exception:
        cap = 64 * 1024 * 1024
    return min(64 * 1024 * 1024, (3 * cap) // 4)


def _mse_single_kernel(out_ref, hm_ref, loss_ref, *, inv_n):
    """Whole reduce range fits in one block: direct per-batch-row sum."""
    d = out_ref[...].astype(jnp.float32) - hm_ref[...].astype(jnp.float32)
    sq = d * d
    s = jnp.sum(sq, axis=2, keepdims=True)   # (bb, rows, 1)
    s = jnp.sum(s, axis=1, keepdims=True)    # (bb, 1, 1)
    loss_ref[...] = (s * inv_n).astype(loss_ref.dtype)


def _mse_reduce_kernel(out_ref, hm_ref, loss_ref, acc_ref, *,
                       inv_n, rt, rows_total, needs_mask):
    """Multi-block reduce: folded (8,128) accumulator, masked ragged tail."""
    ki = pl.program_id(2)

    @pl.when(ki == 0)
    def _():
        acc_ref[...] = jnp.zeros_like(acc_ref)

    d = out_ref[...].astype(jnp.float32) - hm_ref[...].astype(jnp.float32)
    sq = d * d

    if needs_mask:
        # Rows at/after rows_total are pipeline padding (partially mapped last
        # block) or clamped re-reads of the last block (fully-OOB tail blocks
        # created by the even core split): zero them before accumulating.
        g = pl.program_id(0) * pl.num_programs(2) + ki      # unclamped global block
        row_idx = g * rt + jax.lax.broadcasted_iota(jnp.int32, (rt, _LANE), 0)
        sq = jnp.where(row_idx < rows_total, sq, 0.0)

    # Fold the sublane axis so the resident accumulator is a single (8,128)
    # tile: same number of VALU adds, no (rt,128) read-modify-write per step.
    acc_ref[...] += jnp.sum(sq.reshape(rt // 8, 8, _LANE), axis=0)

    @pl.when(ki == pl.num_programs(2) - 1)
    def _():
        lane = jnp.sum(acc_ref[...], axis=0, keepdims=True)  # (1, 128)
        tot = jnp.sum(lane, axis=1, keepdims=True)           # (1, 1)
        loss_ref[...] = (tot * inv_n).astype(loss_ref.dtype)


def _heatmap_loss_single(output, heatmap, target_rows=None):
    """Per-batch MSE over (C, H, W) for one NCHW tensor pair -> shape [B]."""
    assert output.shape == heatmap.shape, "output/heatmap shape mismatch"
    b = output.shape[0]
    n = 1
    for s in output.shape[1:]:
        n *= s
    itemsize = jnp.dtype(output.dtype).itemsize

    if target_rows is None:
        # ~4 MiB per input block regardless of dtype (bf16 -> 2x the rows).
        target_rows = max(8, (_TARGET_BLOCK_BYTES // (_LANE * itemsize)) // 8 * 8)
    assert target_rows % 8 == 0, "reduce tile rows must be a sublane multiple"

    out2d = output.reshape(b, n)
    hm2d = heatmap.reshape(b, n)

    rows_total = _cdiv(n, _LANE)
    n_pad = rows_total * _LANE
    if n_pad != n:
        # Minimal lane padding (< 128 elements per batch row) to form the
        # lane-major view.  Zero padding contributes 0 to the SSE; the mean is
        # normalized by the true element count.
        out2d = jnp.pad(out2d, ((0, 0), (0, n_pad - n)))
        hm2d = jnp.pad(hm2d, ((0, 0), (0, n_pad - n)))

    out3d = out2d.reshape(b, rows_total, _LANE)
    hm3d = hm2d.reshape(b, rows_total, _LANE)

    inv_n = 1.0 / float(n)
    vmem_limit = _vmem_limit_bytes()
    cost = pl.CostEstimate(
        flops=3 * b * n,
        transcendentals=0,
        bytes_accessed=2 * b * n * itemsize + b * 4,
    )

    if rows_total <= target_rows:
        # ---------- single reduce block per batch row (no accumulator) -------
        bb = min(b, max(1, _TARGET_BLOCK_BYTES // (rows_total * _LANE * itemsize)))
        kernel = functools.partial(_mse_single_kernel, inv_n=inv_n)
        loss = pl.pallas_call(
            kernel,
            out_shape=jax.ShapeDtypeStruct((b, 1, 1), jnp.float32),
            grid_spec=pltpu.PrefetchScalarGridSpec(
                num_scalar_prefetch=0,
                grid=(_cdiv(b, bb),),
                in_specs=[
                    pl.BlockSpec((bb, rows_total, _LANE), lambda i: (i, 0, 0)),
                    pl.BlockSpec((bb, rows_total, _LANE), lambda i: (i, 0, 0)),
                ],
                out_specs=pl.BlockSpec((bb, 1, 1), lambda i: (i, 0, 0)),
            ),
            compiler_params=pltpu.CompilerParams(
                dimension_semantics=("parallel",),
                vmem_limit_bytes=vmem_limit,
            ),
            cost_estimate=cost,
        )(out3d, hm3d)
        return loss.reshape(b)

    # ---------- multi-block reduce with resident (8,128) accumulator ---------
    rt = target_rows
    total_blocks = _cdiv(rows_total, rt)
    # When B gives the v7x megacore nothing to shard, split the reduce range
    # across a leading parallel axis of size 2 (costs one extra tiny add on
    # single-core chips) and add the partial sums in the wrapper.
    num_splits = 2 if (b == 1 and total_blocks >= 2) else 1
    ks = _cdiv(total_blocks, num_splits)
    needs_mask = (num_splits * ks * rt) != rows_total

    def in_index(si, bi, ki):
        # Clamp tail blocks that would start past the array (even core split
        # with an odd number of blocks); the kernel masks them to zero anyway.
        g = jnp.minimum(si * ks + ki, total_blocks - 1)
        return (bi, g, 0)

    kernel = functools.partial(
        _mse_reduce_kernel, inv_n=inv_n, rt=rt,
        rows_total=rows_total, needs_mask=needs_mask)

    partial_loss = pl.pallas_call(
        kernel,
        out_shape=jax.ShapeDtypeStruct((num_splits, b, 1, 1), jnp.float32),
        grid_spec=pltpu.PrefetchScalarGridSpec(
            num_scalar_prefetch=0,
            grid=(num_splits, b, ks),
            in_specs=[
                pl.BlockSpec((None, rt, _LANE), in_index),
                pl.BlockSpec((None, rt, _LANE), in_index),
            ],
            out_specs=pl.BlockSpec((None, None, 1, 1),
                                   lambda si, bi, ki: (si, bi, 0, 0)),
            scratch_shapes=[pltpu.VMEM((8, _LANE), jnp.float32)],
        ),
        compiler_params=pltpu.CompilerParams(
            dimension_semantics=("parallel", "parallel", "arbitrary"),
            vmem_limit_bytes=vmem_limit,
        ),
        cost_estimate=cost,
    )(out3d, hm3d)

    return partial_loss.reshape(num_splits, b).sum(axis=0)


def heatmap_loss(outputs, heatmaps):
    """Pallas equivalent of HeatmapLoss.forward.

    Args:
      outputs:  list of [B, C, H, W] arrays (NCHW).
      heatmaps: list of [B, C, H, W] arrays (NCHW).
    Returns:
      list of [B] per-batch loss arrays (one per input pair).
    """
    return [_heatmap_loss_single(o, t) for o, t in zip(outputs, heatmaps)]


if __name__ == "__main__":
    key = jax.random.PRNGKey(0)

    # Pyramid levels, like EfficientTrack heads.  Third level has a
    # non-128-multiple C*H*W (lane padding path); fourth level is bf16.
    shapes = [(2, 4, 16, 16), (2, 4, 8, 8), (2, 3, 10, 10)]
    outputs, heatmaps = [], []
    for shp in shapes:
        key, k1, k2 = jax.random.split(key, 3)
        outputs.append(jax.random.normal(k1, shp, dtype=jnp.float32))
        heatmaps.append(jax.random.normal(k2, shp, dtype=jnp.float32))
    key, k1, k2 = jax.random.split(key, 3)
    outputs.append(jax.random.normal(k1, (2, 4, 8, 8), dtype=jnp.bfloat16))
    heatmaps.append(jax.random.normal(k2, (2, 4, 8, 8), dtype=jnp.bfloat16))

    losses = heatmap_loss(outputs, heatmaps)
    losses = [jax.block_until_ready(l) for l in losses]

    for got, o, t in zip(losses, outputs, heatmaps):
        of = o.astype(jnp.float32)
        tf = t.astype(jnp.float32)
        ref = jnp.mean((of - tf) ** 2, axis=(1, 2, 3))
        assert got.shape == ref.shape
        assert jnp.allclose(got, ref, rtol=1e-5, atol=1e-5), (got, ref)

    # Exercise the general multi-block path (folded accumulator, in-kernel
    # ragged-tail masking, clamped OOB tail block, reduce-range core split for
    # B == 1) using a deliberately small reduce tile.
    key, k1, k2 = jax.random.split(key, 3)
    o_big = jax.random.normal(k1, (1, 4, 25, 25), dtype=jnp.float32)
    t_big = jax.random.normal(k2, (1, 4, 25, 25), dtype=jnp.float32)
    got = jax.block_until_ready(_heatmap_loss_single(o_big, t_big, target_rows=8))
    ref = jnp.mean((o_big - t_big) ** 2, axis=(1, 2, 3))
    assert got.shape == ref.shape
    assert jnp.allclose(got, ref, rtol=1e-5, atol=1e-5), (got, ref)

    print("KERNEL_OK")
</pallas_src>

<mosaic_0001>
module attributes {stable_mosaic.version = 11 : i64} {
  func.func @_mse_single_kernel(%arg0: i32, %arg1: memref<2x8x128xf32, #tpu.memory_space<vmem>>, %arg2: memref<2x8x128xf32, #tpu.memory_space<vmem>>, %arg3: memref<2x1x1xf32, #tpu.memory_space<vmem>>) attributes {dimension_semantics = [#tpu.dimension_semantics<parallel>], iteration_bounds = array<i64: 1>, scalar_prefetch = 0 : i64, scratch_operands = 0 : i64, tpu.core_type = #tpu.core_type<tc>, window_params = [{transform_indices = @transform_0, window_bounds = array<i64: 2, 8, 128>}, {transform_indices = @transform_1, window_bounds = array<i64: 2, 8, 128>}, {transform_indices = @transform_2, window_bounds = array<i64: 2, 1, 1>}]} {
    %c0 = arith.constant 0 : index
    %c0_0 = arith.constant 0 : index
    %c0_1 = arith.constant 0 : index
    %0 = vector.load %arg1[%c0, %c0_0, %c0_1] : memref<2x8x128xf32, #tpu.memory_space<vmem>>, vector<2x8x128xf32>
    %c0_2 = arith.constant 0 : index
    %c0_3 = arith.constant 0 : index
    %c0_4 = arith.constant 0 : index
    %1 = vector.load %arg2[%c0_2, %c0_3, %c0_4] : memref<2x8x128xf32, #tpu.memory_space<vmem>>, vector<2x8x128xf32>
    %2 = arith.subf %0, %1 : vector<2x8x128xf32>
    %3 = arith.mulf %2, %2 : vector<2x8x128xf32>
    %cst = arith.constant dense<0.000000e+00> : vector<2x8xf32>
    %4 = vector.multi_reduction <add>, %3, %cst [2] : vector<2x8x128xf32> to vector<2x8xf32>
    %5 = vector.shape_cast %4 : vector<2x8xf32> to vector<2x8x1xf32>
    %cst_5 = arith.constant dense<0.000000e+00> : vector<2x1xf32>
    %6 = vector.multi_reduction <add>, %5, %cst_5 [1] : vector<2x8x1xf32> to vector<2x1xf32>
    %7 = vector.shape_cast %6 : vector<2x1xf32> to vector<2x1x1xf32>
    %cst_6 = arith.constant 9.765625E-4 : f32
    %8 = vector.broadcast %cst_6 : f32 to vector<2x1x1xf32>
    %9 = arith.mulf %7, %8 : vector<2x1x1xf32>
    %c0_7 = arith.constant 0 : index
    %c0_8 = arith.constant 0 : index
    %c0_9 = arith.constant 0 : index
    %10 = vector.load %arg3[%c0_7, %c0_8, %c0_9] : memref<2x1x1xf32, #tpu.memory_space<vmem>>, vector<2x1x1xf32>
    tpu.vector_store %arg3[%c0_7, %c0_8, %c0_9], %9 {strides = array<i32>} : memref<2x1x1xf32, #tpu.memory_space<vmem>>, vector<2x1x1xf32>,
    return
  }
  func.func @transform_0(%arg0: i32) -> (i32, i32, i32) {
    %c0_i32 = arith.constant 0 : i32
    %c0_i32_0 = arith.constant 0 : i32
    %c0_i32_1 = arith.constant 0 : i32
    return %arg0, %c0_i32, %c0_i32_0 : i32, i32, i32
  }
  func.func @transform_1(%arg0: i32) -> (i32, i32, i32) {
    %c0_i32 = arith.constant 0 : i32
    %c0_i32_0 = arith.constant 0 : i32
    %c0_i32_1 = arith.constant 0 : i32
    return %arg0, %c0_i32, %c0_i32_0 : i32, i32, i32
  }
  func.func @transform_2(%arg0: i32) -> (i32, i32, i32) {
    %c0_i32 = arith.constant 0 : i32
    %c0_i32_0 = arith.constant 0 : i32
    %c0_i32_1 = arith.constant 0 : i32
    return %arg0, %c0_i32, %c0_i32_0 : i32, i32, i32
  }
}

</mosaic_0001>

<llo_original>
// kernel: tpu_custom_call.1
$region0: #{tpu_custom_call.1}
  #allocation0 [shape = 'u32[]', space=smem, size = 0x4, offset = 0x4, fixed_abs, tag = 'smem constant byte address 0x4 - core index']
  #allocation1 [shape = 'u32[144,128]{1,0:T(1,128)}', space=vmem, size = 0x12000, scoped, tag = 'internal scratch']
  %s0 = inlined_call_operand.hbm [shape: f32[2,8,128], index: 0, kind: input, shape index: {}]
  %s1 = inlined_call_operand.hbm [shape: f32[2,8,128], index: 1, kind: input, shape index: {}]
  %s2 = inlined_call_operand.vmem [shape: f32[2,1,1], index: 2, kind: output, shape index: {}]
  %s3 = sld [smem:[#allocation0]]
  $region26: #{tpu_custom_call.1} parent=0
    _
  %s5 = ssub.s32 1, %s3
  %s6 = scalar_select 0, %s5, %s3
  $region1: #{tpu_custom_call.1} parent=0
    #allocation2 [shape = 'u8[8192]{0}', space=vmem, size = 0x2000, scoped, tag = 'input window, operand 0, single buffered']
    #allocation3 [shape = 's32[1]{0}', space=sflag, size = 0x4, scoped, tag = 'scoped memory for tpu_custom_call.1']
    #allocation4 [shape = 'u8[8192]{0}', space=vmem, size = 0x2000, scoped, tag = 'input window, operand 1, single buffered']
    #allocation5 [shape = 's32[1]{0}', space=sflag, size = 0x4, scoped, tag = 'scoped memory for tpu_custom_call.1']
    %7 = vsyncpa [#allocation3], 0
    %8 = vsyncpa [#allocation5], 0
    // Predicated region
    $region2: #{tpu_custom_call.1} parent=1 // pred_check
      _
    $region3: #{tpu_custom_call.1} parent=1 // pred_check_branch
      %10 = sbr.rel (0) target = $region5
    $region4: #{tpu_custom_call.1} parent=1 // pred_region
      %s12 = ssub.s32 256, 256
      %13 = vsyncadd [#allocation3], %s12
      %s14 = sshll.u32 [#allocation2], 4
      %s15 = int_to_ptr.vmem [resolvable:$true] %s14
      %20 = dma.hbm_to_vmem [thread:$0]  %s0, 256, %s15, [#allocation3], 128, 128, 8
    $region5: #{tpu_custom_call.1} parent=1 // pred_fallthru
      _
    // Predicated region
    $region6: #{tpu_custom_call.1} parent=1 // pred_check
      _
    $region7: #{tpu_custom_call.1} parent=1 // pred_check_branch
      %22 = sbr.rel (0) target = $region9
    $region8: #{tpu_custom_call.1} parent=1 // pred_region
      %s24 = ssub.s32 256, 256
      %25 = vsyncadd [#allocation5], %s24
      %s26 = sshll.u32 [#allocation4], 4
      %s27 = int_to_ptr.vmem [resolvable:$true] %s26
      %32 = dma.hbm_to_vmem [thread:$0]  %s1, 256, %s27, [#allocation5], 128, 128, 8
    $region9: #{tpu_custom_call.1} parent=1 // pred_fallthru
      _
    // Predicated region
    $region10: #{tpu_custom_call.1} parent=1 // pred_check
      _
    $region11: #{tpu_custom_call.1} parent=1 // pred_check_branch
      %34 = sbr.rel (0) target = $region13
    $region12: #{tpu_custom_call.1} parent=1 // pred_region
      %35 = dma.done [#allocation3], 256
    $region13: #{tpu_custom_call.1} parent=1 // pred_fallthru
      _
    // Predicated region
    $region14: #{tpu_custom_call.1} parent=1 // pred_check
      _
    $region15: #{tpu_custom_call.1} parent=1 // pred_check_branch
      %37 = sbr.rel (0) target = $region17
    $region16: #{tpu_custom_call.1} parent=1 // pred_region
      %38 = dma.done [#allocation5], 256
    $region17: #{tpu_custom_call.1} parent=1 // pred_fallthru
      _
    %v39 = vld [vmem:[#allocation2] sm:$0xff]
    %v40 = vld [vmem:[#allocation2 + $0x8] sm:$0xff]
    %v41 = vld [vmem:[#allocation4] sm:$0xff]
    %v42 = vld [vmem:[#allocation4 + $0x8] sm:$0xff]
    %v43 = vsub.f32 %v39, %v41
    %v44 = vsub.f32 %v40, %v42
    %v45 = vmul.f32 %v43, %v43
    %v46 = vmul.f32 %v44, %v44
    %47 = vadd.xlane.f32.xlu0 %v45
    %v48 = vpop.xlane.xlu0 %47
    %49 = vadd.xlane.f32.xlu0 %v46
    %v50 = vpop.xlane.xlu0 %49
    %v51 = vrot.slane %v48, 4
    %v52 = vadd.f32 %v48, %v51
    %v53 = vrot.slane %v52, 2
    %v54 = vadd.f32 %v52, %v53
    %v55 = vrot.slane %v54, 1
    %v56 = vadd.f32 %v54, %v55
    %v57 = vrot.slane %v50, 4
    %v58 = vadd.f32 %v50, %v57
    %v59 = vrot.slane %v58, 2
    %v60 = vadd.f32 %v58, %v59
    %v61 = vrot.slane %v60, 1
    %v62 = vadd.f32 %v60, %v61
    %v63 = vmul.f32 %v56, 0.0009765625
    %v64 = vmul.f32 %v62, 0.0009765625
    %vm65 = vcmask 0
    %66 = vst.msk [vmem:[%s2] sm:$0x1] %vm65, %v63
    %67 = vst.msk [vmem:[%s2 + $0x1] sm:$0x1] %vm65, %v64
    // Predicated region
    $region18: #{tpu_custom_call.1} parent=1 // pred_check
      _
    $region19: #{tpu_custom_call.1} parent=1 // pred_check_branch
      %69 = sbr.rel (0) target = $region21
    $region20: #{tpu_custom_call.1} parent=1 // pred_region
      _
    $region21: #{tpu_custom_call.1} parent=1 // pred_fallthru
      _
    // Predicated region
    $region22: #{tpu_custom_call.1} parent=1 // pred_check
      _
    $region23: #{tpu_custom_call.1} parent=1 // pred_check_branch
      %71 = sbr.rel (0) target = $region25
    $region24: #{tpu_custom_call.1} parent=1 // pred_region
      _
    $region25: #{tpu_custom_call.1} parent=1 // pred_fallthru
      _
    %72 = vsyncpa [#allocation3], 1
    %73 = vsyncpa [#allocation5], 1

</llo_original>
